<compile_context>
chip_gen: v6e
topology: v6e:2x2x1
jax: 0.10.0
libtpu: 0.0.40
codegen_flags: <defaults>
</compile_context>

<pallas_src>
import functools

import jax
import jax.numpy as jnp
from jax.experimental import pallas as pl
from jax.experimental.pallas import tpu as pltpu

LN_EPS = 1e-5


# --------------------------------------------------------------------------
# Pallas kernel
# --------------------------------------------------------------------------

def _layernorm_kernel(x_ref, g_ref, b_ref, o_ref, *, eps, inv_c):
    # x_ref/o_ref: (C, THW)   g_ref/b_ref: (C, 1)
    # Upcast to f32 for the statistics / normalize math (bf16-safe), cast back
    # to the I/O dtype only on the final store.
    x = x_ref[...].astype(jnp.float32)
    g = g_ref[...].astype(jnp.float32)
    b = b_ref[...].astype(jnp.float32)

    # Fused one-pass statistics over the channel (sublane) axis.
    mean = jnp.sum(x, axis=0, keepdims=True) * inv_c            # (1, THW)
    mean_sq = jnp.sum(x * x, axis=0, keepdims=True) * inv_c     # (1, THW)
    var = jnp.maximum(mean_sq - mean * mean, 0.0)               # unbiased=False
    std = jnp.sqrt(var)

    # Single per-position reciprocal of (std + eps), broadcast-multiplied over C.
    inv = pl.reciprocal(std + eps, approx=False)                # (1, THW)

    o_ref[...] = ((x - mean) * inv * g + b).astype(o_ref.dtype)


# --------------------------------------------------------------------------
# Wrapper
# --------------------------------------------------------------------------

def _choose_spatial_tile(hw, c, batch):
    """Lane-dense spatial tile: multiple of 128, ~2 MiB f32 per block, <=4096."""
    hw_pad = ((hw + 127) // 128) * 128
    target_bytes = 2 * 1024 * 1024
    max_lanes = max(128, (target_bytes // (c * 4)) // 128 * 128)
    thw = min(4096, max_lanes, hw_pad)
    # v7x megacore: make sure the total parallel grid has >=2 steps when we can,
    # so both TensorCores get work (no-op on v5e/v6e).
    n_sp = (hw + thw - 1) // thw
    if batch * n_sp < 2 and hw_pad >= 256:
        thw = ((hw_pad // 2 + 127) // 128) * 128
    return thw


def channel_layernorm(x_nchw, g, b, eps=LN_EPS):
    B, C, H, W = x_nchw.shape
    HW = H * W
    THW = _choose_spatial_tile(HW, C, B)
    n_sp = pl.cdiv(HW, THW)

    x3 = x_nchw.reshape(B, C, HW)
    g2 = g.reshape(C, 1)
    b2 = b.reshape(C, 1)

    kernel = functools.partial(_layernorm_kernel, eps=eps, inv_c=1.0 / C)

    # Keep double-buffered in+out blocks comfortably inside VMEM on every
    # generation (v7x has only 64 MiB per TC); cap the scoped limit at 48 MiB.
    block_bytes = C * THW * x3.dtype.itemsize
    vmem_limit = int(min(48 * 2**20, max(32 * 2**20, 10 * block_bytes)))

    out = pl.pallas_call(
        kernel,
        out_shape=jax.ShapeDtypeStruct((B, C, HW), x3.dtype),
        grid=(B, n_sp),
        in_specs=[
            # None squeezes the batch dim out of the kernel-side Ref.
            pl.BlockSpec((None, C, THW), lambda i, j: (i, 0, j)),
            pl.BlockSpec((C, 1), lambda i, j: (0, 0)),
            pl.BlockSpec((C, 1), lambda i, j: (0, 0)),
        ],
        out_specs=pl.BlockSpec((None, C, THW), lambda i, j: (i, 0, j)),
        compiler_params=pltpu.CompilerParams(
            dimension_semantics=("parallel", "parallel"),
            vmem_limit_bytes=vmem_limit,
        ),
    )(x3, g2, b2)

    return out.reshape(B, C, H, W)


# --------------------------------------------------------------------------
# Pure-JAX reference (mirrors the PyTorch module)
# --------------------------------------------------------------------------

def layernorm_ref(x, g, b, eps=LN_EPS):
    x = x.astype(jnp.float32)
    mean = jnp.mean(x, axis=1, keepdims=True)
    var = jnp.mean((x - mean) ** 2, axis=1, keepdims=True)      # unbiased=False
    std = jnp.sqrt(var)
    return (x - mean) / (std + eps) * g + b


if __name__ == "__main__":
    key = jax.random.PRNGKey(0)
    fwd = jax.jit(channel_layernorm)

    # ---- Test 1: small CvT-ish shape, 128-aligned spatial extent ----------
    B, C, H, W = 2, 32, 16, 16
    kx, kg, kb, kx2, kx3 = jax.random.split(key, 5)
    x = jax.random.normal(kx, (B, C, H, W), dtype=jnp.float32)
    g = 1.0 + 0.1 * jax.random.normal(kg, (1, C, 1, 1), dtype=jnp.float32)
    b = 0.1 * jax.random.normal(kb, (1, C, 1, 1), dtype=jnp.float32)

    out = fwd(x, g, b)
    jax.block_until_ready(out)
    ref = layernorm_ref(x, g, b)
    assert out.shape == (B, C, H, W)
    assert bool(jnp.all(jnp.isfinite(out)))
    err = float(jnp.max(jnp.abs(out - ref)))
    assert err < 1e-4, f"f32 aligned: max abs error {err}"

    # ---- Test 2: non-128-aligned spatial size (padded tail block) ---------
    B2, H2, W2 = 1, 14, 14                       # HW = 196, not a 128-multiple
    x2 = jax.random.normal(kx2, (B2, C, H2, W2), dtype=jnp.float32)
    out2 = fwd(x2, g, b)
    jax.block_until_ready(out2)
    ref2 = layernorm_ref(x2, g, b)
    assert bool(jnp.all(jnp.isfinite(out2)))
    err2 = float(jnp.max(jnp.abs(out2 - ref2)))
    assert err2 < 1e-4, f"f32 tail: max abs error {err2}"

    # ---- Test 3: bf16 activations (f32 statistics inside the kernel) ------
    x3 = jax.random.normal(kx3, (B, C, H, W), dtype=jnp.float32)
    out3 = fwd(x3.astype(jnp.bfloat16), g, b)
    jax.block_until_ready(out3)
    assert out3.dtype == jnp.bfloat16
    ref3 = layernorm_ref(x3.astype(jnp.bfloat16), g, b)
    err3 = float(jnp.max(jnp.abs(out3.astype(jnp.float32) - ref3)))
    assert err3 < 5e-2, f"bf16: max abs error {err3}"

    print("KERNEL_OK")
</pallas_src>

<mosaic_0001>
module attributes {stable_mosaic.version = 11 : i64} {
  func.func @_layernorm_kernel(%arg0: i32, %arg1: i32, %arg2: memref<1x32x256xf32, #tpu.memory_space<vmem>>, %arg3: memref<32x1xf32, #tpu.memory_space<vmem>>, %arg4: memref<32x1xf32, #tpu.memory_space<vmem>>, %arg5: memref<1x32x256xf32, #tpu.memory_space<vmem>>) attributes {dimension_semantics = [#tpu.dimension_semantics<parallel>, #tpu.dimension_semantics<parallel>], iteration_bounds = array<i64: 2, 1>, scalar_prefetch = 0 : i64, scratch_operands = 0 : i64, tpu.core_type = #tpu.core_type<tc>, window_params = [{transform_indices = @transform_0, window_bounds = array<i64: 1, 32, 256>}, {pipeline_mode = #tpu.pipeline_mode<synchronous>, transform_indices = @transform_1, window_bounds = array<i64: 32, 1>}, {pipeline_mode = #tpu.pipeline_mode<synchronous>, transform_indices = @transform_2, window_bounds = array<i64: 32, 1>}, {transform_indices = @transform_3, window_bounds = array<i64: 1, 32, 256>}]} {
    %c0 = arith.constant 0 : index
    %c0_0 = arith.constant 0 : index
    %c0_1 = arith.constant 0 : index
    %0 = vector.load %arg2[%c0, %c0_0, %c0_1] : memref<1x32x256xf32, #tpu.memory_space<vmem>>, vector<1x32x256xf32>
    %1 = vector.shape_cast %0 : vector<1x32x256xf32> to vector<32x256xf32>
    %c0_2 = arith.constant 0 : index
    %c0_3 = arith.constant 0 : index
    %2 = vector.load %arg3[%c0_2, %c0_3] : memref<32x1xf32, #tpu.memory_space<vmem>>, vector<32x1xf32>
    %c0_4 = arith.constant 0 : index
    %c0_5 = arith.constant 0 : index
    %3 = vector.load %arg4[%c0_4, %c0_5] : memref<32x1xf32, #tpu.memory_space<vmem>>, vector<32x1xf32>
    %cst = arith.constant dense<0.000000e+00> : vector<256xf32>
    %4 = vector.multi_reduction <add>, %1, %cst [0] : vector<32x256xf32> to vector<256xf32>
    %5 = vector.shape_cast %4 : vector<256xf32> to vector<1x256xf32>
    %cst_6 = arith.constant 3.125000e-02 : f32
    %6 = vector.broadcast %cst_6 : f32 to vector<1x256xf32>
    %7 = arith.mulf %5, %6 : vector<1x256xf32>
    %8 = arith.mulf %1, %1 : vector<32x256xf32>
    %cst_7 = arith.constant dense<0.000000e+00> : vector<256xf32>
    %9 = vector.multi_reduction <add>, %8, %cst_7 [0] : vector<32x256xf32> to vector<256xf32>
    %10 = vector.shape_cast %9 : vector<256xf32> to vector<1x256xf32>
    %cst_8 = arith.constant 3.125000e-02 : f32
    %11 = vector.broadcast %cst_8 : f32 to vector<1x256xf32>
    %12 = arith.mulf %10, %11 : vector<1x256xf32>
    %13 = arith.mulf %7, %7 : vector<1x256xf32>
    %14 = arith.subf %12, %13 : vector<1x256xf32>
    %cst_9 = arith.constant 0.000000e+00 : f32
    %15 = vector.broadcast %cst_9 : f32 to vector<1x256xf32>
    %16 = arith.maximumf %14, %15 : vector<1x256xf32>
    %17 = math.sqrt %16 : vector<1x256xf32>
    %cst_10 = arith.constant 9.99999974E-6 : f32
    %18 = vector.broadcast %cst_10 : f32 to vector<1x256xf32>
    %19 = arith.addf %17, %18 : vector<1x256xf32>
    %20 = tpu.reciprocal %19 : vector<1x256xf32> -> vector<1x256xf32>
    %21 = vector.broadcast %7 : vector<1x256xf32> to vector<32x256xf32>
    %22 = arith.subf %1, %21 : vector<32x256xf32>
    %23 = vector.broadcast %20 : vector<1x256xf32> to vector<32x256xf32>
    %24 = arith.mulf %22, %23 : vector<32x256xf32>
    %25 = vector.broadcast %2 : vector<32x1xf32> to vector<32x256xf32>
    %26 = arith.mulf %24, %25 : vector<32x256xf32>
    %27 = vector.broadcast %3 : vector<32x1xf32> to vector<32x256xf32>
    %28 = arith.addf %26, %27 : vector<32x256xf32>
    %c0_11 = arith.constant 0 : index
    %c0_12 = arith.constant 0 : index
    %c0_13 = arith.constant 0 : index
    %29 = vector.load %arg5[%c0_11, %c0_12, %c0_13] : memref<1x32x256xf32, #tpu.memory_space<vmem>>, vector<1x32x256xf32>
    %30 = vector.shape_cast %29 : vector<1x32x256xf32> to vector<32x256xf32>
    %31 = vector.shape_cast %28 : vector<32x256xf32> to vector<1x32x256xf32>
    tpu.vector_store %arg5[%c0_11, %c0_12, %c0_13], %31 {strides = array<i32>} : memref<1x32x256xf32, #tpu.memory_space<vmem>>, vector<1x32x256xf32>,
    return
  }
  func.func @transform_0(%arg0: i32, %arg1: i32) -> (i32, i32, i32) {
    %c0_i32 = arith.constant 0 : i32
    %c0_i32_0 = arith.constant 0 : i32
    return %arg0, %c0_i32, %arg1 : i32, i32, i32
  }
  func.func @transform_1(%arg0: i32, %arg1: i32) -> (i32, i32) {
    %c0_i32 = arith.constant 0 : i32
    %c0_i32_0 = arith.constant 0 : i32
    %c0_i32_1 = arith.constant 0 : i32
    return %c0_i32, %c0_i32_0 : i32, i32
  }
  func.func @transform_2(%arg0: i32, %arg1: i32) -> (i32, i32) {
    %c0_i32 = arith.constant 0 : i32
    %c0_i32_0 = arith.constant 0 : i32
    %c0_i32_1 = arith.constant 0 : i32
    return %c0_i32, %c0_i32_0 : i32, i32
  }
  func.func @transform_3(%arg0: i32, %arg1: i32) -> (i32, i32, i32) {
    %c0_i32 = arith.constant 0 : i32
    %c0_i32_0 = arith.constant 0 : i32
    return %arg0, %c0_i32, %arg1 : i32, i32, i32
  }
}

</mosaic_0001>

<llo_original>
// kernel: channel_layernorm.1
$region0: #{channel_layernorm.1}
  #allocation0 [shape = 'u32[]', space=smem, size = 0x4, offset = 0x4, fixed_abs, tag = 'smem constant byte address 0x4 - core index']
  #allocation1 [shape = 'u32[144,128]{1,0:T(1,128)}', space=vmem, size = 0x12000, scoped, tag = 'internal scratch']
  %s0 = inlined_call_operand.vmem [shape: f32[2,32,256], index: 0, kind: input, shape index: {}]
  %s1 = inlined_call_operand.vmem [shape: f32[32,1], index: 1, kind: input, shape index: {}]
  %s2 = inlined_call_operand.vmem [shape: f32[32,1], index: 2, kind: input, shape index: {}]
  %s3 = inlined_call_operand.vmem [shape: f32[2,32,256], index: 3, kind: output, shape index: {}]
  %s4 = sld [smem:[#allocation0]]
  $region45: #{channel_layernorm.1} parent=0
    _
  %s6 = ssub.s32 1, %s4
  %s7 = scalar_select 0, %s6, %s4
  loop: start=0, step=1, limit=4
  $region2: #{channel_layernorm.1} parent=0 // loop_pre_header
    _
  $region3: #{channel_layernorm.1} parent=0 // loop_header
    %s9 = sphi 0, %s13
    %p10 = scmp.ge.s32.totalorder %s9, 4
    %s16 = sphi 0, %s28
    %s17 = sphi 0, %s24
    %s18 = sphi 0, %s16
    %s19 = sphi 0, %s17
    %s20 = sphi 0, %s18
    %s21 = sphi 0, %s19
    %s33 = sphi 0, %s35
    %s36 = sphi 0, %s33
    %s37 = sphi 0, %s36
    %s53 = sphi 0, %s37
    %s57 = sphi 0, %s57
    %s59 = sphi 0, %s57
    %s60 = sphi 0, %s59
    %s74 = sphi 0, %s60
    %s78 = sphi 0, %s78
    %s80 = sphi 0, %s78
    %s81 = sphi 0, %s80
    %s95 = sphi 0, %s81
    %s103 = sphi 0, %s105
    %s106 = sphi 0, %s103
    %s107 = sphi 0, %s106
    %s123 = sphi 0, %s107
  $region4: #{channel_layernorm.1} parent=0 // loop_header_branch
    %12 = sbr.rel (%p10) target = $region8
  $region5: #{channel_layernorm.1} parent=0 // loop_body
    %s14 = ssub.s32 %s9, 1
    %s15 = ssub.s32 %s9, 2
    %s22 = sadd.s32 1, %s17
    %p23 = scmp.ge.s32.totalorder %s22, 1
    %s24 = scalar_select %p23, 0, %s22
    %s25 = sadd.s32 1, %s16
    %s26 = scalar_select %p23, %s25, %s16
    %p27 = scmp.ge.s32.totalorder %s26, 2
    %s28 = scalar_select %p27, 0, %s26
    %s29 = ssub.s32 %s16, %s28
    %s30 = ssub.s32 %s17, %s24
    %s31 = sor.u32 %s29, %s30
    %p32 = scmp.eq.s32.totalorder %s31, 0
    %s34 = sadd.s32 %s33, 1
    %s35 = scalar_select %p32, %s33, %s34
    %p38 = pneg %p32
    %p39 = scmp.eq.s32.totalorder %s9, 1
    %p40 = por %p38, %p39
    %p41 = scmp.ne.s32.totalorder %s33, %s36
    %p42 = scmp.eq.s32.totalorder %s9, 0
    %p43 = por %p41, %p42
    %p44 = scmp.ne.s32.totalorder %s33, %s36
    %p45 = scmp.eq.s32.totalorder %s14, 1
    %p46 = por %p44, %p45
    %p47 = scmp.ne.s32.totalorder %s36, %s37
    %p48 = scmp.eq.s32.totalorder %s14, 0
    %p49 = por %p47, %p48
    %p50 = scmp.ne.s32.totalorder %s36, %s37
    %p51 = scmp.eq.s32.totalorder %s15, 1
    %p52 = por %p50, %p51
    %p54 = scmp.ne.s32.totalorder %s37, %s53
    %p55 = scmp.eq.s32.totalorder %s15, 0
    %p56 = por %p54, %p55
    %s58 = sadd.s32 %s57, 1
    %p61 = scmp.eq.s32.totalorder %s9, 1
    %p62 = scmp.ne.s32.totalorder %s57, %s59
    %p63 = scmp.eq.s32.totalorder %s9, 0
    %p64 = por %p62, %p63
    %p65 = scmp.ne.s32.totalorder %s57, %s59
    %p66 = scmp.eq.s32.totalorder %s14, 1
    %p67 = por %p65, %p66
    %p68 = scmp.ne.s32.totalorder %s59, %s60
    %p69 = scmp.eq.s32.totalorder %s14, 0
    %p70 = por %p68, %p69
    %p71 = scmp.ne.s32.totalorder %s59, %s60
    %p72 = scmp.eq.s32.totalorder %s15, 1
    %p73 = por %p71, %p72
    %p75 = scmp.ne.s32.totalorder %s60, %s74
    %p76 = scmp.eq.s32.totalorder %s15, 0
    %p77 = por %p75, %p76
    %s79 = sadd.s32 %s78, 1
    %p82 = scmp.eq.s32.totalorder %s9, 1
    %p83 = scmp.ne.s32.totalorder %s78, %s80
    %p84 = scmp.eq.s32.totalorder %s9, 0
    %p85 = por %p83, %p84
    %p86 = scmp.ne.s32.totalorder %s78, %s80
    %p87 = scmp.eq.s32.totalorder %s14, 1
    %p88 = por %p86, %p87
    %p89 = scmp.ne.s32.totalorder %s80, %s81
    %p90 = scmp.eq.s32.totalorder %s14, 0
    %p91 = por %p89, %p90
    %p92 = scmp.ne.s32.totalorder %s80, %s81
    %p93 = scmp.eq.s32.totalorder %s15, 1
    %p94 = por %p92, %p93
    %p96 = scmp.ne.s32.totalorder %s81, %s95
    %p97 = scmp.eq.s32.totalorder %s15, 0
    %p98 = por %p96, %p97
    %s99 = ssub.s32 %s16, %s28
    %s100 = ssub.s32 %s17, %s24
    %s101 = sor.u32 %s99, %s100
    %p102 = scmp.eq.s32.totalorder %s101, 0
    %s104 = sadd.s32 %s103, 1
    %s105 = scalar_select %p102, %s103, %s104
    %p108 = pneg %p102
    %p109 = scmp.eq.s32.totalorder %s9, 1
    %p110 = por %p108, %p109
    %p111 = scmp.ne.s32.totalorder %s103, %s106
    %p112 = scmp.eq.s32.totalorder %s9, 0
    %p113 = por %p111, %p112
    %p114 = scmp.ne.s32.totalorder %s103, %s106
    %p115 = scmp.eq.s32.totalorder %s14, 1
    %p116 = por %p114, %p115
    %p117 = scmp.ne.s32.totalorder %s106, %s107
    %p118 = scmp.eq.s32.totalorder %s14, 0
    %p119 = por %p117, %p118
    %p120 = scmp.ne.s32.totalorder %s106, %s107
    %p121 = scmp.eq.s32.totalorder %s15, 1
    %p122 = por %p120, %p121
    %p124 = scmp.ne.s32.totalorder %s107, %s123
    %p125 = scmp.eq.s32.totalorder %s15, 0
    %p126 = por %p124, %p125
    %p127 = scmp.le.s32.totalorder 1, %s9
    %p128 = scmp.lt.s32.totalorder %s9, 3
    %p129 = pnand %p127, %p128
    %p130 = pneg %p129
    // Predicated region
    $region9: #{channel_layernorm.1} parent=5 // pred_check
      _
    $region10: #{channel_layernorm.1} parent=5 // pred_check_branch
      %132 = sbr.rel (%p129) target = $region12
    $region11: #{channel_layernorm.1} parent=5 // pred_region
      %s133 = ssub.s32 %s9, 1
      // Predicated region
      $region13: #{channel_layernorm.1} parent=11 // pred_check
        %p134 = pneg %p70
      $region14: #{channel_layernorm.1} parent=11 // pred_check_branch
        %136 = sbr.rel (%p134) target = $region16
      $region15: #{channel_layernorm.1} parent=11 // pred_region
        _
      $region16: #{channel_layernorm.1} parent=11 // pred_fallthru
        _
      // Predicated region
      $region17: #{channel_layernorm.1} parent=11 // pred_check
        %p137 = pneg %p91
      $region18: #{channel_layernorm.1} parent=11 // pred_check_branch
        %139 = sbr.rel (%p137) target = $region20
      $region19: #{channel_layernorm.1} parent=11 // pred_region
        _
      $region20: #{channel_layernorm.1} parent=11 // pred_fallthru
        _
    $region12: #{channel_layernorm.1} parent=5 // pred_fallthru
      _
    %p140 = scmp.lt.s32.totalorder %s9, 2
    // Predicated region
    $region21: #{channel_layernorm.1} parent=5 // pred_check
      %p141 = pneg %p140
    $region22: #{channel_layernorm.1} parent=5 // pred_check_branch
      %143 = sbr.rel (%p141) target = $region24
    $region23: #{channel_layernorm.1} parent=5 // pred_region
      // Predicated region
      $region25: #{channel_layernorm.1} parent=23 // pred_check
        %p144 = pneg %p43
      $region26: #{channel_layernorm.1} parent=23 // pred_check_branch
        %146 = sbr.rel (%p144) target = $region28
      $region27: #{channel_layernorm.1} parent=23 // pred_region
        %s147 = smul.u32 2, %s17
        %p148 = scmp.lt.s32.totalorder %s16, 1
        %s149 = scalar_select %p148, %s16, 1
        %p150 = scmp.lt.s32.totalorder %s147, 1
        %s151 = scalar_select %p150, %s147, 1
        %s152 = smul.addr %s149, 8
        %s153 = sadd.s32 %s151, %s152
        %s154 = smul.addr %s153, 8
        %s155 = scalar_lea.vmem %s0, %s154
        %s156 = smul.u32 2, %s17
      $region28: #{channel_layernorm.1} parent=23 // pred_fallthru
        _
    $region24: #{channel_layernorm.1} parent=5 // pred_fallthru
      _
    %p157 = scmp.le.s32.totalorder 1, %s9
    %p158 = scmp.lt.s32.totalorder %s9, 3
    %p159 = pnand %p157, %p158
    %p160 = pneg %p159
    // Predicated region
    $region29: #{channel_layernorm.1} parent=5 // pred_check
      _
    $region30: #{channel_layernorm.1} parent=5 // pred_check_branch
      %162 = sbr.rel (%p159) target = $region32
    $region31: #{channel_layernorm.1} parent=5 // pred_region
      %s163 = ssub.s32 %s9, 1
      %s164 = smul.u32 2, %s19
      %p165 = scmp.lt.s32.totalorder %s18, 1
      %s166 = scalar_select %p165, %s18, 1
      %p167 = scmp.lt.s32.totalorder %s164, 1
      %s168 = scalar_select %p167, %s164, 1
      %s169 = smul.addr %s166, 8
      %s170 = sadd.s32 %s168, %s169
      %s171 = smul.addr %s170, 8
      %s172 = scalar_lea.vmem %s0, %s171
      %p173 = pneg %p49
      %p174 = pneg %p46
      %p175 = pneg %p70
      %p176 = pneg %p67
      %p177 = pneg %p91
      %p178 = pneg %p88
      %p179 = pneg %p119
      %p180 = pneg %p116
      %s181 = smul.u32 2, %s19
      %p182 = scmp.lt.s32.totalorder %s18, 1
      %s183 = scalar_select %p182, %s18, 1
      %p184 = scmp.lt.s32.totalorder %s181, 1
      %s185 = scalar_select %p184, %s181, 1
      %s186 = smul.addr %s183, 8
      %s187 = sadd.s32 %s185, %s186
      %s188 = smul.addr %s187, 8
      %s189 = scalar_lea.vmem %s3, %s188
      %s190 = smul.u32 2, %s19
      %p191 = scmp.lt.s32.totalorder %s18, 1
      %s192 = scalar_select %p191, %s18, 1
      %p193 = scmp.lt.s32.totalorder %s190, 1
      %s194 = scalar_select %p193, %s190, 1
      %s195 = smul.addr %s192, 8
      %s196 = sadd.s32 %s194, %s195
      %s197 = smul.addr %s196, 8
      %s198 = scalar_lea.vmem %s0, %s197
      %s199 = smul.u32 2, %s19
      %s200 = smul.u32 2, %s19
      %p201 = scmp.lt.s32.totalorder %s18, 1
      %s202 = scalar_select %p201, %s18, 1
      %p203 = scmp.lt.s32.totalorder %s200, 1
      %s204 = scalar_select %p203, %s200, 1
      %s205 = smul.addr %s202, 8
      %s206 = sadd.s32 %s204, %s205
      %s207 = smul.addr %s206, 8
      %s208 = scalar_lea.vmem %s3, %s207
      %s209 = smul.u32 2, %s19
      %v210 = vld [vmem:[%s198] sm:$0xff]
      %v211 = vld [vmem:[%s198 + $0x8] sm:$0xff]
      %v212 = vld [vmem:[%s198 + $0x10] sm:$0xff]
      %v213 = vld [vmem:[%s198 + $0x18] sm:$0xff]
      %v214 = vld [vmem:[%s198 + $0x20] sm:$0xff]
      %v215 = vld [vmem:[%s198 + $0x28] sm:$0xff]
      %v216 = vld [vmem:[%s198 + $0x30] sm:$0xff]
      %v217 = vld [vmem:[%s198 + $0x38] sm:$0xff]
      %v218 = vld [vmem:[%s1] sm:$0xff]
      %v219 = vld [vmem:[%s1 + $0x8] sm:$0xff]
      %v220 = vld [vmem:[%s1 + $0x10] sm:$0xff]
      %v221 = vld [vmem:[%s1 + $0x18] sm:$0xff]
      %v222 = vld [vmem:[%s2] sm:$0xff]
      %v223 = vld [vmem:[%s2 + $0x8] sm:$0xff]
      %v224 = vld [vmem:[%s2 + $0x10] sm:$0xff]
      %v225 = vld [vmem:[%s2 + $0x18] sm:$0xff]
      %v226 = vadd.f32 %v210, %v212
      %v227 = vadd.f32 %v226, %v214
      %v228 = vadd.f32 %v227, %v216
      %v229 = vrot.slane %v228, 4
      %v230 = vadd.f32 %v228, %v229
      %v231 = vrot.slane %v230, 2
      %v232 = vadd.f32 %v230, %v231
      %v233 = vrot.slane %v232, 1
      %v234 = vadd.f32 %v232, %v233
      %v235 = vadd.f32 %v211, %v213
      %v236 = vadd.f32 %v235, %v215
      %v237 = vadd.f32 %v236, %v217
      %v238 = vrot.slane %v237, 4
      %v239 = vadd.f32 %v237, %v238
      %v240 = vrot.slane %v239, 2
      %v241 = vadd.f32 %v239, %v240
      %v242 = vrot.slane %v241, 1
      %v243 = vadd.f32 %v241, %v242
      %v244 = vmul.f32 %v234, 0.03125
      %v245 = vmul.f32 %v243, 0.03125
      %v246 = vmul.f32 %v210, %v210
      %v247 = vmul.f32 %v211, %v211
      %v248 = vmul.f32 %v212, %v212
      %v249 = vmul.f32 %v213, %v213
      %v250 = vmul.f32 %v214, %v214
      %v251 = vmul.f32 %v215, %v215
      %v252 = vmul.f32 %v216, %v216
      %v253 = vmul.f32 %v217, %v217
      %v254 = vadd.f32 %v246, %v248
      %v255 = vadd.f32 %v254, %v250
      %v256 = vadd.f32 %v255, %v252
      %v257 = vrot.slane %v256, 4
      %v258 = vadd.f32 %v256, %v257
      %v259 = vrot.slane %v258, 2
      %v260 = vadd.f32 %v258, %v259
      %v261 = vrot.slane %v260, 1
      %v262 = vadd.f32 %v260, %v261
      %v263 = vadd.f32 %v247, %v249
      %v264 = vadd.f32 %v263, %v251
      %v265 = vadd.f32 %v264, %v253
      %v266 = vrot.slane %v265, 4
      %v267 = vadd.f32 %v265, %v266
      %v268 = vrot.slane %v267, 2
      %v269 = vadd.f32 %v267, %v268
      %v270 = vrot.slane %v269, 1
      %v271 = vadd.f32 %v269, %v270
      %v272 = vmul.f32 %v262, 0.03125
      %v273 = vmul.f32 %v271, 0.03125
      %v274 = vmul.f32 %v244, %v244
      %v275 = vmul.f32 %v245, %v245
      %v276 = vsub.f32 %v272, %v274
      %v277 = vsub.f32 %v273, %v275
      %v278 = vmax.f32 %v276, 0.0
      %v279 = vmax.f32 %v277, 0.0
      %v280 = vrsqrt.pop %v278
      %v281 = vmul.f32 %v278, %v280
      %vm282 = vcmp.eq.f32.partialorder %v278, inf
      %v283 = vsel %vm282, %v278, %v281
      %vm284 = vcmp.eq.f32.partialorder %v278, 0.0
      %v285 = vand.u32 %v278, 2147483648
      %v286 = vsel %vm284, %v285, %v283
      %v287 = vrsqrt.pop %v279
      %v288 = vmul.f32 %v279, %v287
      %vm289 = vcmp.eq.f32.partialorder %v279, inf
      %v290 = vsel %vm289, %v279, %v288
      %vm291 = vcmp.eq.f32.partialorder %v279, 0.0
      %v292 = vand.u32 %v279, 2147483648
      %v293 = vsel %vm291, %v292, %v290
      %v294 = vadd.f32 %v286, 1e-05
      %v295 = vadd.f32 %v293, 1e-05
      %v296 = vrcp.pop %v294
      %v297 = vrcp.pop %v295
      %v298 = vsub.f32 %v210, %v244
      %v299 = vsub.f32 %v211, %v245
      %v300 = vsub.f32 %v212, %v244
      %v301 = vsub.f32 %v213, %v245
      %v302 = vsub.f32 %v214, %v244
      %v303 = vsub.f32 %v215, %v245
      %v304 = vsub.f32 %v216, %v244
      %v305 = vsub.f32 %v217, %v245
      %v306 = vmul.f32 %v298, %v296
      %v307 = vmul.f32 %v299, %v297
      %v308 = vmul.f32 %v300, %v296
      %v309 = vmul.f32 %v301, %v297
      %v310 = vmul.f32 %v302, %v296
      %v311 = vmul.f32 %v303, %v297
      %v312 = vmul.f32 %v304, %v296
      %v313 = vmul.f32 %v305, %v297
      %315 = vset.pattern.permute.xlu0 0
      %316 = vperm.xlu0 %315, %v218
      %v317 = vpop.permute.xlu0 %316
      %320 = vset.pattern.permute.xlu0 0
      %321 = vperm.xlu0 %320, %v219
      %v322 = vpop.permute.xlu0 %321
      %325 = vset.pattern.permute.xlu0 0
      %326 = vperm.xlu0 %325, %v220
      %v327 = vpop.permute.xlu0 %326
      %330 = vset.pattern.permute.xlu0 0
      %331 = vperm.xlu0 %330, %v221
      %v332 = vpop.permute.xlu0 %331
      %v334 = vmul.f32 %v306, %v317
      %v335 = vmul.f32 %v307, %v317
      %v336 = vmul.f32 %v308, %v322
      %v337 = vmul.f32 %v309, %v322
      %v338 = vmul.f32 %v310, %v327
      %v339 = vmul.f32 %v311, %v327
      %v340 = vmul.f32 %v312, %v332
      %v341 = vmul.f32 %v313, %v332
      %343 = vset.pattern.permute.xlu0 0
      %344 = vperm.xlu0 %343, %v222
      %v345 = vpop.permute.xlu0 %344
      %348 = vset.pattern.permute.xlu0 0
      %349 = vperm.xlu0 %348, %v223
      %v350 = vpop.permute.xlu0 %349
      %353 = vset.pattern.permute.xlu0 0
      %354 = vperm.xlu0 %353, %v224
      %v355 = vpop.permute.xlu0 %354
      %358 = vset.pattern.permute.xlu0 0
      %359 = vperm.xlu0 %358, %v225
      %v360 = vpop.permute.xlu0 %359
      %v362 = vadd.f32 %v334, %v345
      %v363 = vadd.f32 %v335, %v345
      %v364 = vadd.f32 %v336, %v350
      %v365 = vadd.f32 %v337, %v350
      %v366 = vadd.f32 %v338, %v355
      %v367 = vadd.f32 %v339, %v355
      %v368 = vadd.f32 %v340, %v360
      %v369 = vadd.f32 %v341, %v360
      %370 = vst [vmem:[%s208] sm:$0xff] %v362
      %371 = vst [vmem:[%s208 + $0x8] sm:$0xff] %v363
      %372 = vst [vmem:[%s208 + $0x10] sm:$0xff] %v364
      %373 = vst [vmem:[%s208 + $0x18] sm:$0xff] %v365
      %374 = vst [vmem:[%s208 + $0x20] sm:$0xff] %v366
      %375 = vst [vmem:[%s208 + $0x28] sm:$0xff] %v367
      %376 = vst [vmem:[%s208 + $0x30] sm:$0xff] %v368
      %377 = vst [vmem:[%s208 + $0x38] sm:$0xff] %v369
      %s378 = smul.u32 2, %s19
      %p379 = scmp.lt.s32.totalorder %s18, 1
      %s380 = scalar_select %p379, %s18, 1
      %p381 = scmp.lt.s32.totalorder %s378, 1
      %s382 = scalar_select %p381, %s378, 1
      %s383 = smul.addr %s380, 8
      %s384 = sadd.s32 %s382, %s383
      %s385 = smul.addr %s384, 8
      %s386 = scalar_lea.vmem %s3, %s385
      // Predicated region
      $region33: #{channel_layernorm.1} parent=31 // pred_check
        %p387 = pneg %p116
      $region34: #{channel_layernorm.1} parent=31 // pred_check_branch
        %389 = sbr.rel (%p387) target = $region36
      $region35: #{channel_layernorm.1} parent=31 // pred_region
        %s390 = smul.u32 2, %s19
      $region36: #{channel_layernorm.1} parent=31 // pred_fallthru
        _
    $region32: #{channel_layernorm.1} parent=5 // pred_fallthru
      _
    %p391 = scmp.le.s32.totalorder 2, %s9
    // Predicated region
    $region37: #{channel_layernorm.1} parent=5 // pred_check
      %p392 = pneg %p391
    $region38: #{channel_layernorm.1} parent=5 // pred_check_branch
      %394 = sbr.rel (%p392) target = $region40
    $region39: #{channel_layernorm.1} parent=5 // pred_region
      %s395 = ssub.s32 %s9, 2
      // Predicated region
      $region41: #{channel_layernorm.1} parent=39 // pred_check
        %p396 = pneg %p122
      $region42: #{channel_layernorm.1} parent=39 // pred_check_branch
        %398 = sbr.rel (%p396) target = $region44
      $region43: #{channel_layernorm.1} parent=39 // pred_region
        %s399 = smul.u32 2, %s21
        %p400 = scmp.lt.s32.totalorder %s20, 1
        %s401 = scalar_select %p400, %s20, 1
        %p402 = scmp.lt.s32.totalorder %s399, 1
        %s403 = scalar_select %p402, %s399, 1
        %s404 = smul.addr %s401, 8
        %s405 = sadd.s32 %s403, %s404
        %s406 = smul.addr %s405, 8
        %s407 = scalar_lea.vmem %s3, %s406
      $region44: #{channel_layernorm.1} parent=39 // pred_fallthru
        _
    $region40: #{channel_layernorm.1} parent=5 // pred_fallthru
      _
  $region6: #{channel_layernorm.1} parent=0 // loop_footer
    %s13 = sadd.s32 1, %s9
  $region7: #{channel_layernorm.1} parent=0 // loop_footer_branch
    %8 = sbr.rel target = $region3
  $region8: #{channel_layernorm.1} parent=0 // loop_exit
    _

</llo_original>
